<compile_context>
chip_gen: v7x
topology: tpu7x:2x2x1
jax: 0.10.0
libtpu: 0.0.40
codegen_flags: <defaults>
</compile_context>

<pallas_src>
from functools import partial

import jax
import jax.numpy as jnp
from jax.experimental import pallas as pl
from jax.experimental.pallas import tpu as pltpu

LANES = 128
SUBLANES = 8
DEFAULT_BLOCK_ROWS = 2048  # (2048, 128) f32 = 1 MiB per stream block

# Deterministic module "__init__" defaults of the PyTorch module.
SPLITTING_RATIO_INIT = 0.5
COUPLING_LENGTH = 1e-4  # unused by forward()
# phase_offset is an nn.Parameter of the reference module but is never used in
# forward(), so it does not appear in the kernel.


def _coupler_kernel(tk_ref, x1_ref, x2_ref, o1_ref, o2_ref):
    # (t, k) precomputed in the wrapper; SMEM scalar reads + broadcast are
    # negligible next to the streaming traffic.
    t = tk_ref[0]
    k = tk_ref[1]

    x1 = x1_ref[...]   # [TB, 128] f32, fully lane-dense
    x2 = x2_ref[...]

    o1_ref[...] = t * x1 + k * x2
    o2_ref[...] = k * x1 + t * x2


def _round_up(x, m):
    return ((x + m - 1) // m) * m


@partial(jax.jit, static_argnames=("block_rows",))
def directional_coupler_forward(input_1, input_2, splitting_ratio,
                                block_rows=DEFAULT_BLOCK_ROWS):
    """input_1, input_2: [batch, n_wavelengths] f32; splitting_ratio: [1] or scalar.

    Returns (output_1, output_2) with the same shape as the inputs.
    """
    orig_shape = input_1.shape
    x1 = input_1.astype(jnp.float32).reshape(-1)
    x2 = input_2.astype(jnp.float32).reshape(-1)
    n = x1.shape[0]

    # Scalar parameter math hoisted out of the kernel (clamp + 2 sqrt).
    ratio = jnp.asarray(splitting_ratio, jnp.float32).reshape(-1)[0]
    kappa = jnp.clip(ratio, 0.01, 0.99)
    tk = jnp.stack([jnp.sqrt(jnp.float32(1.0) - kappa), jnp.sqrt(kappa)])

    # Lane-dense [rows, 128] layout.  Only pad to the (8,128) vreg granule; the
    # cdiv grid handles a ragged last block, so no rounding to the block size.
    rows = _round_up(pl.cdiv(n, LANES), SUBLANES)
    padded = rows * LANES
    if padded != n:
        x1 = jnp.pad(x1, (0, padded - n))
        x2 = jnp.pad(x2, (0, padded - n))
    x1 = x1.reshape(rows, LANES)
    x2 = x2.reshape(rows, LANES)

    tb = min(_round_up(block_rows, SUBLANES), rows)  # multiple of 8, <= rows
    grid = (pl.cdiv(rows, tb),)
    tile_spec = pl.BlockSpec((tb, LANES), lambda i: (i, 0))
    smem_spec = pl.BlockSpec(memory_space=pltpu.MemorySpace.SMEM)

    o1, o2 = pl.pallas_call(
        _coupler_kernel,
        out_shape=(
            jax.ShapeDtypeStruct((rows, LANES), jnp.float32),
            jax.ShapeDtypeStruct((rows, LANES), jnp.float32),
        ),
        grid=grid,
        in_specs=[smem_spec, tile_spec, tile_spec],
        out_specs=(tile_spec, tile_spec),
        compiler_params=pltpu.CompilerParams(
            dimension_semantics=("parallel",)),
    )(tk, x1, x2)

    if padded != n:
        out1 = o1.reshape(-1)[:n].reshape(orig_shape)
        out2 = o2.reshape(-1)[:n].reshape(orig_shape)
    else:
        out1 = o1.reshape(orig_shape)
        out2 = o2.reshape(orig_shape)
    return out1, out2


def _reference_forward(x1, x2, splitting_ratio):
    """Pure-JAX reference mirroring the PyTorch forward."""
    kappa = jnp.clip(splitting_ratio, 0.01, 0.99)
    t = jnp.sqrt(1.0 - kappa)
    k = jnp.sqrt(kappa)
    return t * x1 + k * x2, k * x1 + t * x2


if __name__ == "__main__":
    key = jax.random.PRNGKey(0)
    B, W = 2, 8   # batch_size=2, n_wavelengths=8

    k1, k2 = jax.random.split(key)
    input_1 = jax.random.normal(k1, (B, W), dtype=jnp.float32)
    input_2 = jax.random.normal(k2, (B, W), dtype=jnp.float32)

    # Deterministic parameter init (matches nn.Parameter initial value).
    splitting_ratio = jnp.array([SPLITTING_RATIO_INIT], dtype=jnp.float32)

    out1, out2 = directional_coupler_forward(input_1, input_2, splitting_ratio)
    jax.block_until_ready((out1, out2))

    ref1, ref2 = _reference_forward(input_1, input_2, splitting_ratio)
    assert out1.shape == (B, W) and out2.shape == (B, W)
    assert jnp.allclose(out1, ref1, atol=1e-6, rtol=1e-6)
    assert jnp.allclose(out2, ref2, atol=1e-6, rtol=1e-6)

    # Also exercise a larger, 8x128-aligned shape (zero pad/slice path) and a
    # non-aligned shape (ragged last block path).
    for (bb, ww) in ((64, 2048), (33, 257)):
        a = jax.random.normal(jax.random.PRNGKey(1), (bb, ww), dtype=jnp.float32)
        b = jax.random.normal(jax.random.PRNGKey(2), (bb, ww), dtype=jnp.float32)
        y1, y2 = directional_coupler_forward(a, b, splitting_ratio)
        jax.block_until_ready((y1, y2))
        r1, r2 = _reference_forward(a, b, splitting_ratio)
        assert jnp.allclose(y1, r1, atol=1e-6, rtol=1e-6)
        assert jnp.allclose(y2, r2, atol=1e-6, rtol=1e-6)

    print("KERNEL_OK")
</pallas_src>

<mosaic_0001>
module attributes {stable_mosaic.version = 11 : i64} {
  func.func @_coupler_kernel(%arg0: i32, %arg1: memref<2xf32, #tpu.memory_space<smem>>, %arg2: memref<8x128xf32, #tpu.memory_space<vmem>>, %arg3: memref<8x128xf32, #tpu.memory_space<vmem>>, %arg4: memref<8x128xf32, #tpu.memory_space<vmem>>, %arg5: memref<8x128xf32, #tpu.memory_space<vmem>>) attributes {dimension_semantics = [#tpu.dimension_semantics<parallel>], iteration_bounds = array<i64: 1>, scalar_prefetch = 0 : i64, scratch_operands = 0 : i64, tpu.core_type = #tpu.core_type<tc>, window_params = [{transform_indices = @transform_0, window_bounds = array<i64: 2>}, {transform_indices = @transform_1, window_bounds = array<i64: 8, 128>}, {transform_indices = @transform_2, window_bounds = array<i64: 8, 128>}, {transform_indices = @transform_3, window_bounds = array<i64: 8, 128>}, {transform_indices = @transform_4, window_bounds = array<i64: 8, 128>}]} {
    %c0 = arith.constant 0 : index
    %0 = memref.load %arg1[%c0] : memref<2xf32, #tpu.memory_space<smem>>
    %c1 = arith.constant 1 : index
    %1 = memref.load %arg1[%c1] : memref<2xf32, #tpu.memory_space<smem>>
    %c0_0 = arith.constant 0 : index
    %c0_1 = arith.constant 0 : index
    %2 = vector.load %arg2[%c0_0, %c0_1] : memref<8x128xf32, #tpu.memory_space<vmem>>, vector<8x128xf32>
    %c0_2 = arith.constant 0 : index
    %c0_3 = arith.constant 0 : index
    %3 = vector.load %arg3[%c0_2, %c0_3] : memref<8x128xf32, #tpu.memory_space<vmem>>, vector<8x128xf32>
    %4 = vector.broadcast %0 : f32 to vector<8x128xf32>
    %5 = arith.mulf %4, %2 : vector<8x128xf32>
    %6 = vector.broadcast %1 : f32 to vector<8x128xf32>
    %7 = arith.mulf %6, %3 : vector<8x128xf32>
    %8 = arith.addf %5, %7 : vector<8x128xf32>
    %c0_4 = arith.constant 0 : index
    %c0_5 = arith.constant 0 : index
    %9 = vector.load %arg4[%c0_4, %c0_5] : memref<8x128xf32, #tpu.memory_space<vmem>>, vector<8x128xf32>
    tpu.vector_store %arg4[%c0_4, %c0_5], %8 {strides = array<i32>} : memref<8x128xf32, #tpu.memory_space<vmem>>, vector<8x128xf32>,
    %10 = vector.broadcast %1 : f32 to vector<8x128xf32>
    %11 = arith.mulf %10, %2 : vector<8x128xf32>
    %12 = vector.broadcast %0 : f32 to vector<8x128xf32>
    %13 = arith.mulf %12, %3 : vector<8x128xf32>
    %14 = arith.addf %11, %13 : vector<8x128xf32>
    %c0_6 = arith.constant 0 : index
    %c0_7 = arith.constant 0 : index
    %15 = vector.load %arg5[%c0_6, %c0_7] : memref<8x128xf32, #tpu.memory_space<vmem>>, vector<8x128xf32>
    tpu.vector_store %arg5[%c0_6, %c0_7], %14 {strides = array<i32>} : memref<8x128xf32, #tpu.memory_space<vmem>>, vector<8x128xf32>,
    return
  }
  func.func @transform_0(%arg0: i32) -> i32 {
    %c0_i32 = arith.constant 0 : i32
    %c0_i32_0 = arith.constant 0 : i32
    return %c0_i32 : i32
  }
  func.func @transform_1(%arg0: i32) -> (i32, i32) {
    %c0_i32 = arith.constant 0 : i32
    %c0_i32_0 = arith.constant 0 : i32
    return %arg0, %c0_i32 : i32, i32
  }
  func.func @transform_2(%arg0: i32) -> (i32, i32) {
    %c0_i32 = arith.constant 0 : i32
    %c0_i32_0 = arith.constant 0 : i32
    return %arg0, %c0_i32 : i32, i32
  }
  func.func @transform_3(%arg0: i32) -> (i32, i32) {
    %c0_i32 = arith.constant 0 : i32
    %c0_i32_0 = arith.constant 0 : i32
    return %arg0, %c0_i32 : i32, i32
  }
  func.func @transform_4(%arg0: i32) -> (i32, i32) {
    %c0_i32 = arith.constant 0 : i32
    %c0_i32_0 = arith.constant 0 : i32
    return %arg0, %c0_i32 : i32, i32
  }
}

</mosaic_0001>

<llo_original>
// kernel: directional_coupler_forward.1
$region0: #{directional_coupler_forward.1}
  #allocation0 [shape = 'u32[]', space=smem, size = 0x4, offset = 0x4, fixed_abs, tag = 'smem constant byte address 0x4 - core index']
  #allocation1 [shape = 'u32[144,128]{1,0:T(1,128)}', space=vmem, size = 0x12000, scoped, tag = 'internal scratch']
  %s0 = inlined_call_operand.vmem [shape: f32[2], index: 0, kind: input, shape index: {}]
  %s1 = inlined_call_operand.vmem [shape: f32[8,128], index: 1, kind: input, shape index: {}]
  %s2 = inlined_call_operand.vmem [shape: f32[8,128], index: 2, kind: input, shape index: {}]
  %s3 = inlined_call_operand.vmem [shape: f32[8,128], index: 3, kind: output, shape index: {0}]
  %s4 = inlined_call_operand.vmem [shape: f32[8,128], index: 4, kind: output, shape index: {1}]
  %5 = xla_tuple %s3, %s4
  %s6 = sld [smem:[#allocation0]]
  $region34: #{directional_coupler_forward.1} parent=0
    _
  %s8 = ssub.s32 1, %s6
  %s9 = scalar_select 0, %s8, %s6
  $region1: #{directional_coupler_forward.1} parent=0
    #allocation2 [shape = 'u8[512]{0}', space=smem, size = 0x200, scoped, tag = 'input window, operand 0, single buffered']
    #allocation3 [shape = 's32[1]{0}', space=sflag, size = 0x4, scoped, tag = 'scoped memory for directional_coupler_forward.1']
    %10 = vsyncpa [#allocation3], 0
    // Predicated region
    $region2: #{directional_coupler_forward.1} parent=1 // pred_check
      _
    $region3: #{directional_coupler_forward.1} parent=1 // pred_check_branch
      %12 = sbr.rel (0) target = $region5
    $region4: #{directional_coupler_forward.1} parent=1 // pred_region
      %s14 = ssub.s32 16, 16
      %15 = vsyncadd [#allocation3], %s14
      %s17 = sshll.u32 %s0, 4
      %s18 = int_to_ptr.vmem [resolvable:$true] %s17
      %20 = dma.vmem_to_smem %s18, 16, [#allocation2], [#allocation3]
    $region5: #{directional_coupler_forward.1} parent=1 // pred_fallthru
      _
    // Predicated region
    $region6: #{directional_coupler_forward.1} parent=1 // pred_check
      _
    $region7: #{directional_coupler_forward.1} parent=1 // pred_check_branch
      %22 = sbr.rel (0) target = $region9
    $region8: #{directional_coupler_forward.1} parent=1 // pred_region
      _
    $region9: #{directional_coupler_forward.1} parent=1 // pred_fallthru
      _
    // Predicated region
    $region10: #{directional_coupler_forward.1} parent=1 // pred_check
      _
    $region11: #{directional_coupler_forward.1} parent=1 // pred_check_branch
      %24 = sbr.rel (0) target = $region13
    $region12: #{directional_coupler_forward.1} parent=1 // pred_region
      _
    $region13: #{directional_coupler_forward.1} parent=1 // pred_fallthru
      _
    // Predicated region
    $region14: #{directional_coupler_forward.1} parent=1 // pred_check
      _
    $region15: #{directional_coupler_forward.1} parent=1 // pred_check_branch
      %26 = sbr.rel (0) target = $region17
    $region16: #{directional_coupler_forward.1} parent=1 // pred_region
      %27 = dma.done [#allocation3], 16
    $region17: #{directional_coupler_forward.1} parent=1 // pred_fallthru
      _
    %28 = sfence
    %s29 = sld [smem:[#allocation2]]
    %s30 = sld [smem:[#allocation2 + $0x1]]
    %v31 = vld [vmem:[%s1] sm:$0xff]
    %v32 = vld [vmem:[%s2] sm:$0xff]
    %v33 = vstv %s29
    %v34 = vmul.f32 %v33, %v31
    %v35 = vstv %s30
    %v36 = vmul.f32 %v35, %v32
    %v37 = vadd.f32 %v34, %v36
    %38 = vst [vmem:[%s3] sm:$0xff] %v37
    %v39 = vmul.f32 %v35, %v31
    %v40 = vmul.f32 %v33, %v32
    %v41 = vadd.f32 %v39, %v40
    %42 = vst [vmem:[%s4] sm:$0xff] %v41
    // Predicated region
    $region18: #{directional_coupler_forward.1} parent=1 // pred_check
      _
    $region19: #{directional_coupler_forward.1} parent=1 // pred_check_branch
      %44 = sbr.rel (0) target = $region21
    $region20: #{directional_coupler_forward.1} parent=1 // pred_region
      _
    $region21: #{directional_coupler_forward.1} parent=1 // pred_fallthru
      _
    // Predicated region
    $region22: #{directional_coupler_forward.1} parent=1 // pred_check
      _
    $region23: #{directional_coupler_forward.1} parent=1 // pred_check_branch
      %46 = sbr.rel (0) target = $region25
    $region24: #{directional_coupler_forward.1} parent=1 // pred_region
      _
    $region25: #{directional_coupler_forward.1} parent=1 // pred_fallthru
      _
    // Predicated region
    $region26: #{directional_coupler_forward.1} parent=1 // pred_check
      _
    $region27: #{directional_coupler_forward.1} parent=1 // pred_check_branch
      %48 = sbr.rel (0) target = $region29
    $region28: #{directional_coupler_forward.1} parent=1 // pred_region
      _
    $region29: #{directional_coupler_forward.1} parent=1 // pred_fallthru
      _
    // Predicated region
    $region30: #{directional_coupler_forward.1} parent=1 // pred_check
      _
    $region31: #{directional_coupler_forward.1} parent=1 // pred_check_branch
      %50 = sbr.rel (0) target = $region33
    $region32: #{directional_coupler_forward.1} parent=1 // pred_region
      _
    $region33: #{directional_coupler_forward.1} parent=1 // pred_fallthru
      _
    %51 = vsyncpa [#allocation3], 1

</llo_original>
